<compile_context>
chip_gen: v7x
topology: tpu7x:2x2x1
jax: 0.10.0
libtpu: 0.0.40
codegen_flags: <defaults>
</compile_context>

<pallas_src>
import numpy as np
import jax
import jax.numpy as jnp
from jax.experimental import pallas as pl
from jax.experimental.pallas import tpu as pltpu


def _pick_batch_block(B: int, max_bt: int = 8) -> int:
    """Largest divisor of B that is <= max_bt while keeping >= 2 grid steps,
    so dimension_semantics=("parallel",) can still use both v7x TensorCores."""
    if B <= 1:
        return 1
    cap = min(max_bt, B // 2)
    for bt in range(cap, 0, -1):
        if B % bt == 0:
            return bt
    return 1


def _make_residual_block_kernel(cin, cout, bt, L, eps, per_batch_params):
    def kernel(x_ref, w_ref, gmat_ref, p_ref, o_ref):
        # Loop-invariants hoisted out of the per-batch loop.
        w = w_ref[...]                    # (Cout, 3*Cin)  stacked [w_k0 | w_k1 | w_k2]
        gmat = gmat_ref[...]              # (Cout, Cout)   group membership / (cpg*L)
        lane = jax.lax.broadcasted_iota(jnp.int32, (cin, L), 1)
        not_first = lane != 0
        not_last = lane != (L - 1)

        # Bt is small and static -> fully unrolled loop (== fori_loop(unroll=True)).
        for b in range(bt):
            x_b = x_ref[b]                                            # (Cin, L)

            # Conv taps built in-kernel (XLU roll + one-lane zero mask == pad=1).
            tap_m1 = jnp.where(not_first, pltpu.roll(x_b, 1, axis=1), 0.0)      # x[l-1]
            tap_p1 = jnp.where(not_last, pltpu.roll(x_b, L - 1, axis=1), 0.0)   # x[l+1]
            xcol = jnp.concatenate([tap_m1, x_b, tap_p1], axis=0)               # (3*Cin, L)

            # Packed per-channel params: [a | c | conv-bias], each (Cout, 1).
            p = p_ref[b] if per_batch_params else p_ref[0]                      # (3*Cout, 1)
            a = p[0:cout, :]
            c = p[cout:2 * cout, :]
            bias = p[2 * cout:3 * cout, :]

            # Conv1d(k=3, pad=1) as one MXU matmul + per-channel bias.
            y = jnp.dot(w, xcol, preferred_element_type=jnp.float32) + bias     # (Cout, L)

            # GroupNorm, centered two-pass.  gmat is pre-scaled by 1/(cpg*L), so
            # one (Cout,Cout)@(Cout,L) matmul + XLU lane reduce yields the
            # per-channel group mean directly (no N=1 matmuls, no relayout).
            mean = jnp.sum(jnp.dot(gmat, y, preferred_element_type=jnp.float32),
                           axis=1, keepdims=True)                               # (Cout, 1)
            d = y - mean
            var = jnp.sum(jnp.dot(gmat, d * d, preferred_element_type=jnp.float32),
                          axis=1, keepdims=True)                                # (Cout, 1)

            # Fused GN affine + FiLM, SiLU, residual.  Lane-dense (L=128k) store.
            z = d * jax.lax.rsqrt(var + eps) * a + c
            o_ref[b] = (z * jax.nn.sigmoid(z) + x_b).astype(o_ref.dtype)

    return kernel


def residual_block_forward(x, weight, bias, gamma, beta, scale_shift=None,
                           groups=8, eps=1e-5, batch_block=None):
    """Residual(Block)(x):  x: (B, C, L) f32, weight: (C, C, 3),
    bias/gamma/beta: (C,).  scale_shift: optional (scale, shift), each
    broadcastable to (B, C, 1)."""
    B, Cin, L = x.shape
    Cout = weight.shape[0]
    assert Cout == Cin, "Residual requires fn to preserve the channel dim"
    assert Cout % groups == 0
    assert Cin % 8 == 0, "keep channel slices sublane-tile aligned"
    assert L % 128 == 0, "keep the output lane-dense (multiple of 128)"

    x = x.astype(jnp.float32)

    bt = batch_block if batch_block is not None else _pick_batch_block(B)
    assert B % bt == 0
    n_steps = B // bt

    # Stacked conv weights (Cout, 3*Cin): [w_k0 | w_k1 | w_k2].
    wst = jnp.concatenate(
        [weight[:, :, 0], weight[:, :, 1], weight[:, :, 2]],
        axis=1).astype(jnp.float32)

    # 0/1 group-membership matrix pre-scaled by 1/(cpg*L), hoisted to wrapper.
    cpg = Cout // groups
    ch = np.arange(Cout) // cpg
    gmat = jnp.asarray(
        (ch[:, None] == ch[None, :]).astype(np.float32) / float(cpg * L))

    # Packed per-channel params [a | c | conv-bias] -> one tiny DMA per step.
    bias_col = bias.reshape(Cout, 1).astype(jnp.float32)
    if scale_shift is None:
        a = gamma.reshape(Cout, 1).astype(jnp.float32)
        c = beta.reshape(Cout, 1).astype(jnp.float32)
        params = jnp.concatenate([a, c, bias_col], axis=0)[None]     # (1, 3*Cout, 1)
        p_spec = pl.BlockSpec((1, 3 * Cout, 1), lambda i: (0, 0, 0))
        per_batch_params = False
    else:
        s_, sh_ = scale_shift
        s_ = jnp.broadcast_to(s_, (B, Cout, 1)).astype(jnp.float32)
        sh_ = jnp.broadcast_to(sh_, (B, Cout, 1)).astype(jnp.float32)
        a = gamma.reshape(1, Cout, 1).astype(jnp.float32) * (s_ + 1.0)
        c = beta.reshape(1, Cout, 1).astype(jnp.float32) * (s_ + 1.0) + sh_
        bias_b = jnp.broadcast_to(bias_col[None], (B, Cout, 1))
        params = jnp.concatenate([a, c, bias_b], axis=1)              # (B, 3*Cout, 1)
        p_spec = pl.BlockSpec((bt, 3 * Cout, 1), lambda i: (i, 0, 0))
        per_batch_params = True

    kernel = _make_residual_block_kernel(Cin, Cout, bt, L, eps, per_batch_params)

    grid_spec = pltpu.PrefetchScalarGridSpec(
        num_scalar_prefetch=0,
        grid=(n_steps,),
        in_specs=[
            pl.BlockSpec((bt, Cin, L), lambda i: (i, 0, 0)),          # raw x
            pl.BlockSpec((Cout, 3 * Cin), lambda i: (0, 0)),          # stacked weights
            pl.BlockSpec((Cout, Cout), lambda i: (0, 0)),             # scaled membership
            p_spec,                                                   # [a | c | bias]
        ],
        out_specs=pl.BlockSpec((bt, Cout, L), lambda i: (i, 0, 0)),
    )

    return pl.pallas_call(
        kernel,
        out_shape=jax.ShapeDtypeStruct((B, Cout, L), jnp.float32),
        grid_spec=grid_spec,
        compiler_params=pltpu.CompilerParams(dimension_semantics=("parallel",)),
    )(x, wst, gmat, params)


def residual_block_reference(x, weight, bias, gamma, beta, scale_shift, groups,
                             eps=1e-5):
    """Pure-JAX reference mirroring the PyTorch forward: block(x, ss) + x."""
    B, Cin, L = x.shape
    Cout = weight.shape[0]
    xp = jnp.pad(x, ((0, 0), (0, 0), (1, 1)))
    y = bias[None, :, None] + sum(
        jnp.einsum('oi,bil->bol', weight[:, :, k], xp[:, :, k:k + L])
        for k in range(3))
    yg = y.reshape(B, groups, (Cout // groups) * L)
    mean = yg.mean(axis=-1, keepdims=True)
    var = ((yg - mean) ** 2).mean(axis=-1, keepdims=True)
    yn = ((yg - mean) / jnp.sqrt(var + eps)).reshape(B, Cout, L)
    yn = yn * gamma[None, :, None] + beta[None, :, None]
    if scale_shift is not None:
        s_, sh_ = scale_shift
        yn = yn * (s_ + 1.0) + sh_
    return yn * jax.nn.sigmoid(yn) + x


if __name__ == "__main__":
    # Small shapes consistent with the module; L=128 keeps the output lane-dense.
    B, DIM, L, GROUPS = 4, 16, 128, 8

    key = jax.random.PRNGKey(0)
    kx, kw, kb, kg, kbe, ks, ksh = jax.random.split(key, 7)

    x = jax.random.normal(kx, (B, DIM, L), jnp.float32)
    fan_in = DIM * 3
    bound = 1.0 / np.sqrt(fan_in)
    weight = jax.random.uniform(kw, (DIM, DIM, 3), jnp.float32, -bound, bound)
    bias = jax.random.uniform(kb, (DIM,), jnp.float32, -bound, bound)
    gamma = 1.0 + 0.1 * jax.random.normal(kg, (DIM,), jnp.float32)
    beta = 0.1 * jax.random.normal(kbe, (DIM,), jnp.float32)
    scale = 0.5 * jax.random.normal(ks, (B, DIM, 1), jnp.float32)
    shift = 0.5 * jax.random.normal(ksh, (B, DIM, 1), jnp.float32)
    scale_shift = (scale, shift)

    # FiLM-conditioned path: B=4 -> Bt=2 per step, 2 parallel grid steps.
    out = jax.block_until_ready(
        residual_block_forward(x, weight, bias, gamma, beta, scale_shift,
                               groups=GROUPS))
    ref = residual_block_reference(x, weight, bias, gamma, beta, scale_shift,
                                   GROUPS)
    np.testing.assert_allclose(np.asarray(out), np.asarray(ref),
                               rtol=1e-4, atol=1e-4)

    # Unconditioned (scale_shift=None) path at B=2 -> Bt=1, 2 grid steps.
    x2 = x[:2]
    out_none = jax.block_until_ready(
        residual_block_forward(x2, weight, bias, gamma, beta, None,
                               groups=GROUPS))
    ref_none = residual_block_reference(x2, weight, bias, gamma, beta, None,
                                        GROUPS)
    np.testing.assert_allclose(np.asarray(out_none), np.asarray(ref_none),
                               rtol=1e-4, atol=1e-4)

    print("KERNEL_OK")
</pallas_src>

<mosaic_0001>
module attributes {stable_mosaic.version = 11 : i64} {
  func.func @kernel(%arg0: i32, %arg1: memref<2x16x128xf32, #tpu.memory_space<vmem>>, %arg2: memref<16x48xf32, #tpu.memory_space<vmem>>, %arg3: memref<16x16xf32, #tpu.memory_space<vmem>>, %arg4: memref<2x48x1xf32, #tpu.memory_space<vmem>>, %arg5: memref<2x16x128xf32, #tpu.memory_space<vmem>>) attributes {dimension_semantics = [#tpu.dimension_semantics<parallel>], iteration_bounds = array<i64: 2>, scalar_prefetch = 0 : i64, scratch_operands = 0 : i64, tpu.core_type = #tpu.core_type<tc>, window_params = [{transform_indices = @transform_0, window_bounds = array<i64: 2, 16, 128>}, {pipeline_mode = #tpu.pipeline_mode<synchronous>, transform_indices = @transform_1, window_bounds = array<i64: 16, 48>}, {pipeline_mode = #tpu.pipeline_mode<synchronous>, transform_indices = @transform_2, window_bounds = array<i64: 16, 16>}, {transform_indices = @transform_3, window_bounds = array<i64: 2, 48, 1>}, {transform_indices = @transform_4, window_bounds = array<i64: 2, 16, 128>}]} {
    %c0 = arith.constant 0 : index
    %c0_0 = arith.constant 0 : index
    %0 = vector.load %arg2[%c0, %c0_0] : memref<16x48xf32, #tpu.memory_space<vmem>>, vector<16x48xf32>
    %c0_1 = arith.constant 0 : index
    %c0_2 = arith.constant 0 : index
    %1 = vector.load %arg3[%c0_1, %c0_2] : memref<16x16xf32, #tpu.memory_space<vmem>>, vector<16x16xf32>
    %2 = tpu.iota {dimensions = array<i32: 1>} : vector<16x128xi32>
    %c0_i32 = arith.constant 0 : i32
    %3 = vector.broadcast %c0_i32 : i32 to vector<16x128xi32>
    %4 = arith.cmpi ne, %2, %3 : vector<16x128xi32>
    %c127_i32 = arith.constant 127 : i32
    %5 = vector.broadcast %c127_i32 : i32 to vector<16x128xi32>
    %6 = arith.cmpi ne, %2, %5 : vector<16x128xi32>
    %c0_3 = arith.constant 0 : index
    %c0_4 = arith.constant 0 : index
    %c0_5 = arith.constant 0 : index
    %7 = vector.load %arg1[%c0_3, %c0_4, %c0_5] : memref<2x16x128xf32, #tpu.memory_space<vmem>>, vector<1x16x128xf32>
    %8 = vector.shape_cast %7 : vector<1x16x128xf32> to vector<16x128xf32>
    %c1_i32 = arith.constant 1 : i32
    %9 = tpu.dynamic_rotate %8 by %c1_i32 dim 1 : vector<16x128xf32>, i32 -> vector<16x128xf32>
    %cst = arith.constant 0.000000e+00 : f32
    %10 = vector.broadcast %cst : f32 to vector<16x128xf32>
    %11 = arith.select %4, %9, %10 : vector<16x128xi1>, vector<16x128xf32>
    %c127_i32_6 = arith.constant 127 : i32
    %12 = tpu.dynamic_rotate %8 by %c127_i32_6 dim 1 : vector<16x128xf32>, i32 -> vector<16x128xf32>
    %cst_7 = arith.constant 0.000000e+00 : f32
    %13 = vector.broadcast %cst_7 : f32 to vector<16x128xf32>
    %14 = arith.select %6, %12, %13 : vector<16x128xi1>, vector<16x128xf32>
    %15 = tpu.concatenate %11, %8, %14 in 0 : vector<16x128xf32>, vector<16x128xf32>, vector<16x128xf32> -> vector<48x128xf32>
    %c0_8 = arith.constant 0 : index
    %c0_9 = arith.constant 0 : index
    %c0_10 = arith.constant 0 : index
    %16 = vector.load %arg4[%c0_8, %c0_9, %c0_10] : memref<2x48x1xf32, #tpu.memory_space<vmem>>, vector<1x48x1xf32>
    %17 = vector.shape_cast %16 : vector<1x48x1xf32> to vector<48x1xf32>
    %18 = vector.extract_strided_slice %17 {offsets = [0, 0], sizes = [16, 1], strides = [1, 1]} : vector<48x1xf32> to vector<16x1xf32>
    %19 = vector.extract_strided_slice %17 {offsets = [16, 0], sizes = [16, 1], strides = [1, 1]} : vector<48x1xf32> to vector<16x1xf32>
    %20 = vector.extract_strided_slice %17 {offsets = [32, 0], sizes = [16, 1], strides = [1, 1]} : vector<48x1xf32> to vector<16x1xf32>
    %cst_11 = arith.constant dense<0.000000e+00> : vector<16x128xf32>
    %21 = tpu.matmul %0, %15, %cst_11 {dimension_numbers = #tpu.dot_dimension_numbers<[1], [0], [0], [1], [0, 0, 1, 1], [], []>} : vector<16x48xf32>, vector<48x128xf32>, vector<16x128xf32> -> vector<16x128xf32>
    %22 = vector.broadcast %20 : vector<16x1xf32> to vector<16x128xf32>
    %23 = arith.addf %21, %22 : vector<16x128xf32>
    %cst_12 = arith.constant dense<0.000000e+00> : vector<16x128xf32>
    %24 = tpu.matmul %1, %23, %cst_12 {dimension_numbers = #tpu.dot_dimension_numbers<[1], [0], [0], [1], [0, 0, 1, 1], [], []>} : vector<16x16xf32>, vector<16x128xf32>, vector<16x128xf32> -> vector<16x128xf32>
    %cst_13 = arith.constant dense<0.000000e+00> : vector<16xf32>
    %25 = vector.multi_reduction <add>, %24, %cst_13 [1] : vector<16x128xf32> to vector<16xf32>
    %26 = vector.shape_cast %25 : vector<16xf32> to vector<16x1xf32>
    %27 = vector.broadcast %26 : vector<16x1xf32> to vector<16x128xf32>
    %28 = arith.subf %23, %27 : vector<16x128xf32>
    %29 = arith.mulf %28, %28 : vector<16x128xf32>
    %cst_14 = arith.constant dense<0.000000e+00> : vector<16x128xf32>
    %30 = tpu.matmul %1, %29, %cst_14 {dimension_numbers = #tpu.dot_dimension_numbers<[1], [0], [0], [1], [0, 0, 1, 1], [], []>} : vector<16x16xf32>, vector<16x128xf32>, vector<16x128xf32> -> vector<16x128xf32>
    %cst_15 = arith.constant dense<0.000000e+00> : vector<16xf32>
    %31 = vector.multi_reduction <add>, %30, %cst_15 [1] : vector<16x128xf32> to vector<16xf32>
    %32 = vector.shape_cast %31 : vector<16xf32> to vector<16x1xf32>
    %cst_16 = arith.constant 9.99999974E-6 : f32
    %33 = vector.broadcast %cst_16 : f32 to vector<16x1xf32>
    %34 = arith.addf %32, %33 : vector<16x1xf32>
    %35 = math.rsqrt %34 : vector<16x1xf32>
    %36 = vector.broadcast %35 : vector<16x1xf32> to vector<16x128xf32>
    %37 = arith.mulf %28, %36 : vector<16x128xf32>
    %38 = vector.broadcast %18 : vector<16x1xf32> to vector<16x128xf32>
    %39 = arith.mulf %37, %38 : vector<16x128xf32>
    %40 = vector.broadcast %19 : vector<16x1xf32> to vector<16x128xf32>
    %41 = arith.addf %39, %40 : vector<16x128xf32>
    %42 = arith.negf %41 : vector<16x128xf32>
    %43 = math.exp %42 : vector<16x128xf32>
    %cst_17 = arith.constant 1.000000e+00 : f32
    %44 = vector.broadcast %cst_17 : f32 to vector<16x128xf32>
    %45 = arith.addf %44, %43 : vector<16x128xf32>
    %46 = arith.divf %44, %45 : vector<16x128xf32>
    %47 = arith.mulf %41, %46 : vector<16x128xf32>
    %48 = arith.addf %47, %8 : vector<16x128xf32>
    %c0_18 = arith.constant 0 : index
    %c0_19 = arith.constant 0 : index
    %c0_20 = arith.constant 0 : index
    %49 = vector.load %arg5[%c0_18, %c0_19, %c0_20] : memref<2x16x128xf32, #tpu.memory_space<vmem>>, vector<1x16x128xf32>
    %50 = vector.shape_cast %49 : vector<1x16x128xf32> to vector<16x128xf32>
    %51 = vector.shape_cast %48 : vector<16x128xf32> to vector<1x16x128xf32>
    tpu.vector_store %arg5[%c0_18, %c0_19, %c0_20], %51 {strides = array<i32>} : memref<2x16x128xf32, #tpu.memory_space<vmem>>, vector<1x16x128xf32>,
    %c1 = arith.constant 1 : index
    %c0_21 = arith.constant 0 : index
    %c0_22 = arith.constant 0 : index
    %52 = vector.load %arg1[%c1, %c0_21, %c0_22] : memref<2x16x128xf32, #tpu.memory_space<vmem>>, vector<1x16x128xf32>
    %53 = vector.shape_cast %52 : vector<1x16x128xf32> to vector<16x128xf32>
    %c1_i32_23 = arith.constant 1 : i32
    %54 = tpu.dynamic_rotate %53 by %c1_i32_23 dim 1 : vector<16x128xf32>, i32 -> vector<16x128xf32>
    %cst_24 = arith.constant 0.000000e+00 : f32
    %55 = vector.broadcast %cst_24 : f32 to vector<16x128xf32>
    %56 = arith.select %4, %54, %55 : vector<16x128xi1>, vector<16x128xf32>
    %c127_i32_25 = arith.constant 127 : i32
    %57 = tpu.dynamic_rotate %53 by %c127_i32_25 dim 1 : vector<16x128xf32>, i32 -> vector<16x128xf32>
    %cst_26 = arith.constant 0.000000e+00 : f32
    %58 = vector.broadcast %cst_26 : f32 to vector<16x128xf32>
    %59 = arith.select %6, %57, %58 : vector<16x128xi1>, vector<16x128xf32>
    %60 = tpu.concatenate %56, %53, %59 in 0 : vector<16x128xf32>, vector<16x128xf32>, vector<16x128xf32> -> vector<48x128xf32>
    %c1_27 = arith.constant 1 : index
    %c0_28 = arith.constant 0 : index
    %c0_29 = arith.constant 0 : index
    %61 = vector.load %arg4[%c1_27, %c0_28, %c0_29] : memref<2x48x1xf32, #tpu.memory_space<vmem>>, vector<1x48x1xf32>
    %62 = vector.shape_cast %61 : vector<1x48x1xf32> to vector<48x1xf32>
    %63 = vector.extract_strided_slice %62 {offsets = [0, 0], sizes = [16, 1], strides = [1, 1]} : vector<48x1xf32> to vector<16x1xf32>
    %64 = vector.extract_strided_slice %62 {offsets = [16, 0], sizes = [16, 1], strides = [1, 1]} : vector<48x1xf32> to vector<16x1xf32>
    %65 = vector.extract_strided_slice %62 {offsets = [32, 0], sizes = [16, 1], strides = [1, 1]} : vector<48x1xf32> to vector<16x1xf32>
    %cst_30 = arith.constant dense<0.000000e+00> : vector<16x128xf32>
    %66 = tpu.matmul %0, %60, %cst_30 {dimension_numbers = #tpu.dot_dimension_numbers<[1], [0], [0], [1], [0, 0, 1, 1], [], []>} : vector<16x48xf32>, vector<48x128xf32>, vector<16x128xf32> -> vector<16x128xf32>
    %67 = vector.broadcast %65 : vector<16x1xf32> to vector<16x128xf32>
    %68 = arith.addf %66, %67 : vector<16x128xf32>
    %cst_31 = arith.constant dense<0.000000e+00> : vector<16x128xf32>
    %69 = tpu.matmul %1, %68, %cst_31 {dimension_numbers = #tpu.dot_dimension_numbers<[1], [0], [0], [1], [0, 0, 1, 1], [], []>} : vector<16x16xf32>, vector<16x128xf32>, vector<16x128xf32> -> vector<16x128xf32>
    %cst_32 = arith.constant dense<0.000000e+00> : vector<16xf32>
    %70 = vector.multi_reduction <add>, %69, %cst_32 [1] : vector<16x128xf32> to vector<16xf32>
    %71 = vector.shape_cast %70 : vector<16xf32> to vector<16x1xf32>
    %72 = vector.broadcast %71 : vector<16x1xf32> to vector<16x128xf32>
    %73 = arith.subf %68, %72 : vector<16x128xf32>
    %74 = arith.mulf %73, %73 : vector<16x128xf32>
    %cst_33 = arith.constant dense<0.000000e+00> : vector<16x128xf32>
    %75 = tpu.matmul %1, %74, %cst_33 {dimension_numbers = #tpu.dot_dimension_numbers<[1], [0], [0], [1], [0, 0, 1, 1], [], []>} : vector<16x16xf32>, vector<16x128xf32>, vector<16x128xf32> -> vector<16x128xf32>
    %cst_34 = arith.constant dense<0.000000e+00> : vector<16xf32>
    %76 = vector.multi_reduction <add>, %75, %cst_34 [1] : vector<16x128xf32> to vector<16xf32>
    %77 = vector.shape_cast %76 : vector<16xf32> to vector<16x1xf32>
    %cst_35 = arith.constant 9.99999974E-6 : f32
    %78 = vector.broadcast %cst_35 : f32 to vector<16x1xf32>
    %79 = arith.addf %77, %78 : vector<16x1xf32>
    %80 = math.rsqrt %79 : vector<16x1xf32>
    %81 = vector.broadcast %80 : vector<16x1xf32> to vector<16x128xf32>
    %82 = arith.mulf %73, %81 : vector<16x128xf32>
    %83 = vector.broadcast %63 : vector<16x1xf32> to vector<16x128xf32>
    %84 = arith.mulf %82, %83 : vector<16x128xf32>
    %85 = vector.broadcast %64 : vector<16x1xf32> to vector<16x128xf32>
    %86 = arith.addf %84, %85 : vector<16x128xf32>
    %87 = arith.negf %86 : vector<16x128xf32>
    %88 = math.exp %87 : vector<16x128xf32>
    %cst_36 = arith.constant 1.000000e+00 : f32
    %89 = vector.broadcast %cst_36 : f32 to vector<16x128xf32>
    %90 = arith.addf %89, %88 : vector<16x128xf32>
    %91 = arith.divf %89, %90 : vector<16x128xf32>
    %92 = arith.mulf %86, %91 : vector<16x128xf32>
    %93 = arith.addf %92, %53 : vector<16x128xf32>
    %c1_37 = arith.constant 1 : index
    %c0_38 = arith.constant 0 : index
    %c0_39 = arith.constant 0 : index
    %94 = vector.load %arg5[%c1_37, %c0_38, %c0_39] : memref<2x16x128xf32, #tpu.memory_space<vmem>>, vector<1x16x128xf32>
    %95 = vector.shape_cast %94 : vector<1x16x128xf32> to vector<16x128xf32>
    %96 = vector.shape_cast %93 : vector<16x128xf32> to vector<1x16x128xf32>
    tpu.vector_store %arg5[%c1_37, %c0_38, %c0_39], %96 {strides = array<i32>} : memref<2x16x128xf32, #tpu.memory_space<vmem>>, vector<1x16x128xf32>,
    return
  }
  func.func @transform_0(%arg0: i32) -> (i32, i32, i32) {
    %c0_i32 = arith.constant 0 : i32
    %c0_i32_0 = arith.constant 0 : i32
    %c0_i32_1 = arith.constant 0 : i32
    return %arg0, %c0_i32, %c0_i32_0 : i32, i32, i32
  }
  func.func @transform_1(%arg0: i32) -> (i32, i32) {
    %c0_i32 = arith.constant 0 : i32
    %c0_i32_0 = arith.constant 0 : i32
    %c0_i32_1 = arith.constant 0 : i32
    return %c0_i32, %c0_i32_0 : i32, i32
  }
  func.func @transform_2(%arg0: i32) -> (i32, i32) {
    %c0_i32 = arith.constant 0 : i32
    %c0_i32_0 = arith.constant 0 : i32
    %c0_i32_1 = arith.constant 0 : i32
    return %c0_i32, %c0_i32_0 : i32, i32
  }
  func.func @transform_3(%arg0: i32) -> (i32, i32, i32) {
    %c0_i32 = arith.constant 0 : i32
    %c0_i32_0 = arith.constant 0 : i32
    %c0_i32_1 = arith.constant 0 : i32
    return %arg0, %c0_i32, %c0_i32_0 : i32, i32, i32
  }
  func.func @transform_4(%arg0: i32) -> (i32, i32, i32) {
    %c0_i32 = arith.constant 0 : i32
    %c0_i32_0 = arith.constant 0 : i32
    %c0_i32_1 = arith.constant 0 : i32
    return %arg0, %c0_i32, %c0_i32_0 : i32, i32, i32
  }
}

</mosaic_0001>

<llo_original>
// kernel: tpu_custom_call.1
$region0: #{tpu_custom_call.1}
  #allocation0 [shape = 'u32[]', space=smem, size = 0x4, offset = 0x4, fixed_abs, tag = 'smem constant byte address 0x4 - core index']
  #allocation1 [shape = 'u32[144,128]{1,0:T(1,128)}', space=vmem, size = 0x12000, scoped, tag = 'internal scratch']
  %s0 = inlined_call_operand.vmem [shape: f32[4,16,128], index: 0, kind: input, shape index: {}]
  %s1 = inlined_call_operand.vmem [shape: f32[16,48], index: 1, kind: input, shape index: {}]
  %s2 = inlined_call_operand.vmem [shape: f32[16,16], index: 2, kind: input, shape index: {}]
  %s3 = inlined_call_operand.vmem [shape: f32[4,48,1], index: 3, kind: input, shape index: {}]
  %s4 = inlined_call_operand.hbm [shape: f32[4,16,128], index: 4, kind: output, shape index: {}]
  %s5 = sld [smem:[#allocation0]]
  $region49: #{tpu_custom_call.1} parent=0
    _
  %s7 = ssub.s32 1, %s5
  %s8 = scalar_select 0, %s7, %s5
  $region1: #{tpu_custom_call.1} parent=0
    #allocation2 [shape = 'u8[32768]{0}', space=vmem, size = 0x8000, scoped, tag = 'output window, operand 0']
    #allocation3 [shape = 's32[2]{0}', space=sflag, size = 0x8, scoped, tag = 'scoped memory for tpu_custom_call.1']
    %9 = vsyncpa [#allocation3], 0
    %s10 = scalar_lea.sflag [#allocation3], 1
    %11 = vsyncpa %s10, 0
    loop: start=0, step=1, limit=4
    $region2: #{tpu_custom_call.1} parent=1 // loop_pre_header
      _
    $region3: #{tpu_custom_call.1} parent=1 // loop_header
      %s13 = sphi 0, %s17
      %p14 = scmp.ge.s32.totalorder %s13, 4
      %s23 = sphi 0, %s25
      %s26 = sphi 0, %s23
      %s27 = sphi 0, %s26
      %s43 = sphi 0, %s27
      %s47 = sphi 0, %s47
      %s49 = sphi 0, %s47
      %s50 = sphi 0, %s49
      %s64 = sphi 0, %s50
      %s68 = sphi 0, %s68
      %s70 = sphi 0, %s68
      %s71 = sphi 0, %s70
      %s85 = sphi 0, %s71
      %s91 = sphi 0, %s93
      %s94 = sphi 0, %s91
      %s95 = sphi 0, %s94
      %s111 = sphi 0, %s95
      %s117 = sphi 0, %s119
      %s120 = sphi 0, %s117
      %s121 = sphi 0, %s120
      %s137 = sphi 0, %s121
    $region4: #{tpu_custom_call.1} parent=1 // loop_header_branch
      %16 = sbr.rel (%p14) target = $region8
    $region5: #{tpu_custom_call.1} parent=1 // loop_body
      %s18 = ssub.s32 %s13, 1
      %s19 = ssub.s32 %s13, 2
      %s20 = sadd.s32 %s13, 1
      %s21 = ssub.s32 %s13, %s20
      %p22 = scmp.eq.s32.totalorder %s21, 0
      %s24 = sadd.s32 %s23, 1
      %s25 = scalar_select %p22, %s23, %s24
      %p28 = pneg %p22
      %p29 = scmp.eq.s32.totalorder %s13, 1
      %p30 = por %p28, %p29
      %p31 = scmp.ne.s32.totalorder %s23, %s26
      %p32 = scmp.eq.s32.totalorder %s13, 0
      %p33 = por %p31, %p32
      %p34 = scmp.ne.s32.totalorder %s23, %s26
      %p35 = scmp.eq.s32.totalorder %s18, 1
      %p36 = por %p34, %p35
      %p37 = scmp.ne.s32.totalorder %s26, %s27
      %p38 = scmp.eq.s32.totalorder %s18, 0
      %p39 = por %p37, %p38
      %p40 = scmp.ne.s32.totalorder %s26, %s27
      %p41 = scmp.eq.s32.totalorder %s19, 1
      %p42 = por %p40, %p41
      %p44 = scmp.ne.s32.totalorder %s27, %s43
      %p45 = scmp.eq.s32.totalorder %s19, 0
      %p46 = por %p44, %p45
      %s48 = sadd.s32 %s47, 1
      %p51 = scmp.eq.s32.totalorder %s13, 1
      %p52 = scmp.ne.s32.totalorder %s47, %s49
      %p53 = scmp.eq.s32.totalorder %s13, 0
      %p54 = por %p52, %p53
      %p55 = scmp.ne.s32.totalorder %s47, %s49
      %p56 = scmp.eq.s32.totalorder %s18, 1
      %p57 = por %p55, %p56
      %p58 = scmp.ne.s32.totalorder %s49, %s50
      %p59 = scmp.eq.s32.totalorder %s18, 0
      %p60 = por %p58, %p59
      %p61 = scmp.ne.s32.totalorder %s49, %s50
      %p62 = scmp.eq.s32.totalorder %s19, 1
      %p63 = por %p61, %p62
      %p65 = scmp.ne.s32.totalorder %s50, %s64
      %p66 = scmp.eq.s32.totalorder %s19, 0
      %p67 = por %p65, %p66
      %s69 = sadd.s32 %s68, 1
      %p72 = scmp.eq.s32.totalorder %s13, 1
      %p73 = scmp.ne.s32.totalorder %s68, %s70
      %p74 = scmp.eq.s32.totalorder %s13, 0
      %p75 = por %p73, %p74
      %p76 = scmp.ne.s32.totalorder %s68, %s70
      %p77 = scmp.eq.s32.totalorder %s18, 1
      %p78 = por %p76, %p77
      %p79 = scmp.ne.s32.totalorder %s70, %s71
      %p80 = scmp.eq.s32.totalorder %s18, 0
      %p81 = por %p79, %p80
      %p82 = scmp.ne.s32.totalorder %s70, %s71
      %p83 = scmp.eq.s32.totalorder %s19, 1
      %p84 = por %p82, %p83
      %p86 = scmp.ne.s32.totalorder %s71, %s85
      %p87 = scmp.eq.s32.totalorder %s19, 0
      %p88 = por %p86, %p87
      %s89 = ssub.s32 %s13, %s20
      %p90 = scmp.eq.s32.totalorder %s89, 0
      %s92 = sadd.s32 %s91, 1
      %s93 = scalar_select %p90, %s91, %s92
      %p96 = pneg %p90
      %p97 = scmp.eq.s32.totalorder %s13, 1
      %p98 = por %p96, %p97
      %p99 = scmp.ne.s32.totalorder %s91, %s94
      %p100 = scmp.eq.s32.totalorder %s13, 0
      %p101 = por %p99, %p100
      %p102 = scmp.ne.s32.totalorder %s91, %s94
      %p103 = scmp.eq.s32.totalorder %s18, 1
      %p104 = por %p102, %p103
      %p105 = scmp.ne.s32.totalorder %s94, %s95
      %p106 = scmp.eq.s32.totalorder %s18, 0
      %p107 = por %p105, %p106
      %p108 = scmp.ne.s32.totalorder %s94, %s95
      %p109 = scmp.eq.s32.totalorder %s19, 1
      %p110 = por %p108, %p109
      %p112 = scmp.ne.s32.totalorder %s95, %s111
      %p113 = scmp.eq.s32.totalorder %s19, 0
      %p114 = por %p112, %p113
      %s115 = ssub.s32 %s13, %s20
      %p116 = scmp.eq.s32.totalorder %s115, 0
      %s118 = sadd.s32 %s117, 1
      %s119 = scalar_select %p116, %s117, %s118
      %p122 = pneg %p116
      %p123 = scmp.eq.s32.totalorder %s13, 1
      %p124 = por %p122, %p123
      %p125 = scmp.ne.s32.totalorder %s117, %s120
      %p126 = scmp.eq.s32.totalorder %s13, 0
      %p127 = por %p125, %p126
      %p128 = scmp.ne.s32.totalorder %s117, %s120
      %p129 = scmp.eq.s32.totalorder %s18, 1
      %p130 = por %p128, %p129
      %p131 = scmp.ne.s32.totalorder %s120, %s121
      %p132 = scmp.eq.s32.totalorder %s18, 0
      %p133 = por %p131, %p132
      %p134 = scmp.ne.s32.totalorder %s120, %s121
      %p135 = scmp.eq.s32.totalorder %s19, 1
      %p136 = por %p134, %p135
      %p138 = scmp.ne.s32.totalorder %s121, %s137
      %p139 = scmp.eq.s32.totalorder %s19, 0
      %p140 = por %p138, %p139
      %p141 = scmp.le.s32.totalorder 1, %s13
      %p142 = scmp.lt.s32.totalorder %s13, 3
      %p143 = pnand %p141, %p142
      %p144 = pneg %p143
      // Predicated region
      $region9: #{tpu_custom_call.1} parent=5 // pred_check
        _
      $region10: #{tpu_custom_call.1} parent=5 // pred_check_branch
        %146 = sbr.rel (%p143) target = $region12
      $region11: #{tpu_custom_call.1} parent=5 // pred_region
        %s147 = ssub.s32 %s13, 1
        // Predicated region
        $region13: #{tpu_custom_call.1} parent=11 // pred_check
          %p148 = pneg %p60
        $region14: #{tpu_custom_call.1} parent=11 // pred_check_branch
          %150 = sbr.rel (%p148) target = $region16
        $region15: #{tpu_custom_call.1} parent=11 // pred_region
          _
        $region16: #{tpu_custom_call.1} parent=11 // pred_fallthru
          _
        // Predicated region
        $region17: #{tpu_custom_call.1} parent=11 // pred_check
          %p151 = pneg %p81
        $region18: #{tpu_custom_call.1} parent=11 // pred_check_branch
          %153 = sbr.rel (%p151) target = $region20
        $region19: #{tpu_custom_call.1} parent=11 // pred_region
          _
        $region20: #{tpu_custom_call.1} parent=11 // pred_fallthru
          _
      $region12: #{tpu_custom_call.1} parent=5 // pred_fallthru
        _
      %p154 = scmp.lt.s32.totalorder %s13, 2
      // Predicated region
      $region21: #{tpu_custom_call.1} parent=5 // pred_check
        %p155 = pneg %p154
      $region22: #{tpu_custom_call.1} parent=5 // pred_check_branch
        %157 = sbr.rel (%p155) target = $region24
      $region23: #{tpu_custom_call.1} parent=5 // pred_region
        // Predicated region
        $region25: #{tpu_custom_call.1} parent=23 // pred_check
          %p158 = pneg %p33
        $region26: #{tpu_custom_call.1} parent=23 // pred_check_branch
          %160 = sbr.rel (%p158) target = $region28
        $region27: #{tpu_custom_call.1} parent=23 // pred_region
          %s161 = smul.u32 2, %s13
          %p162 = scmp.lt.s32.totalorder %s161, 3
          %s163 = scalar_select %p162, %s161, 3
          %s164 = smul.addr %s163, 2
          %s165 = smul.addr %s164, 8
          %s166 = scalar_lea.vmem %s0, %s165
          %s167 = smul.u32 2, %s13
        $region28: #{tpu_custom_call.1} parent=23 // pred_fallthru
          _
        // Predicated region
        $region29: #{tpu_custom_call.1} parent=23 // pred_check
          %p168 = pneg %p101
        $region30: #{tpu_custom_call.1} parent=23 // pred_check_branch
          %170 = sbr.rel (%p168) target = $region32
        $region31: #{tpu_custom_call.1} parent=23 // pred_region
          %s171 = smul.u32 2, %s13
          %p172 = scmp.lt.s32.totalorder %s171, 3
          %s173 = scalar_select %p172, %s171, 3
          %s174 = smul.addr %s173, 6
          %s175 = smul.addr %s174, 8
          %s176 = scalar_lea.vmem %s3, %s175
          %s177 = smul.u32 2, %s13
        $region32: #{tpu_custom_call.1} parent=23 // pred_fallthru
          _
      $region24: #{tpu_custom_call.1} parent=5 // pred_fallthru
        _
      %p178 = scmp.le.s32.totalorder 1, %s13
      %p179 = scmp.lt.s32.totalorder %s13, 3
      %p180 = pnand %p178, %p179
      %p181 = pneg %p180
      // Predicated region
      $region33: #{tpu_custom_call.1} parent=5 // pred_check
        _
      $region34: #{tpu_custom_call.1} parent=5 // pred_check_branch
        %183 = sbr.rel (%p180) target = $region36
      $region35: #{tpu_custom_call.1} parent=5 // pred_region
        %s184 = ssub.s32 %s13, 1
        %s185 = smul.u32 2, %s18
        %p186 = scmp.lt.s32.totalorder %s185, 3
        %s187 = scalar_select %p186, %s185, 3
        %s188 = smul.addr %s187, 2
        %s189 = smul.addr %s188, 8
        %s190 = scalar_lea.vmem %s0, %s189
        %p191 = pneg %p39
        %p192 = pneg %p36
        %p193 = pneg %p60
        %p194 = pneg %p57
        %p195 = pneg %p81
        %p196 = pneg %p78
        %s197 = smul.u32 2, %s18
        %p198 = scmp.lt.s32.totalorder %s197, 3
        %s199 = scalar_select %p198, %s197, 3
        %s200 = smul.addr %s199, 6
        %s201 = smul.addr %s200, 8
        %s202 = scalar_lea.vmem %s3, %s201
        %p203 = pneg %p107
        %p204 = pneg %p104
        %p205 = pneg %p133
        %p206 = pneg %p130
        %s207 = sand.u32 %s120, 1
        %s208 = scalar_lea.sflag [#allocation3], %s207
        %s209 = sand.u32 %s120, 1
        %s210 = smul.addr %s209, 32
        %s211 = scalar_lea.vmem [#allocation2], %s210
        %s212 = smul.u32 2, %s18
        %p213 = scmp.lt.s32.totalorder %s212, 3
        %s214 = scalar_select %p213, %s212, 3
        %s215 = smul.addr %s214, 2
        %s216 = smul.addr %s215, 8
        %s217 = scalar_lea.vmem %s0, %s216
        %s218 = smul.u32 2, %s18
        %s219 = smul.u32 2, %s18
        %p220 = scmp.lt.s32.totalorder %s219, 3
        %s221 = scalar_select %p220, %s219, 3
        %s222 = smul.addr %s221, 6
        %s223 = smul.addr %s222, 8
        %s224 = scalar_lea.vmem %s3, %s223
        %s225 = smul.u32 2, %s18
        %s226 = smul.u32 2, %s18
        %v227 = vld [vmem:[%s1] sm:$0xff]
        %v228 = vld [vmem:[%s1 + $0x8] sm:$0xff]
        %v229 = vld [vmem:[%s2] sm:$0xff]
        %v230 = vld [vmem:[%s2 + $0x8] sm:$0xff]
        %v231 = vlaneseq
        %v232 = vand.u32 %v231, 127
        %vm233 = vcmp.ne.s32.totalorder %v232, 0
        %vm234 = vcmp.ne.s32.totalorder %v232, 127
        %v235 = vld [vmem:[%s217] sm:$0xff]
        %v236 = vld [vmem:[%s217 + $0x8] sm:$0xff]
        %237 = vrot.lane.b32.xlu0 %v235, 1
        %v238 = vpop.permute.xlu0 %237
        %239 = vrot.lane.b32.xlu0 %v236, 1
        %v240 = vpop.permute.xlu0 %239
        %v241 = vsel %vm233, %v238, 0.0
        %v242 = vsel %vm233, %v240, 0.0
        %243 = vrot.lane.b32.xlu0 %v235, 127
        %v244 = vpop.permute.xlu0 %243
        %245 = vrot.lane.b32.xlu0 %v236, 127
        %v246 = vpop.permute.xlu0 %245
        %v247 = vsel %vm234, %v244, 0.0
        %v248 = vsel %vm234, %v246, 0.0
        %v249 = vld [vmem:[%s224] sm:$0xff]
        %v250 = vld [vmem:[%s224 + $0x8] sm:$0xff]
        %v251 = vld [vmem:[%s224 + $0x10] sm:$0xff]
        %v252 = vld [vmem:[%s224 + $0x18] sm:$0xff]
        %v253 = vld [vmem:[%s224 + $0x20] sm:$0xff]
        %v254 = vld [vmem:[%s224 + $0x28] sm:$0xff]
        %256 = vset.pattern.permute.xlu0 0
        %257 = vperm.xlu0 %256, %v253
        %v258 = vpop.permute.xlu0 %257
        %261 = vset.pattern.permute.xlu0 0
        %262 = vperm.xlu0 %261, %v254
        %v263 = vpop.permute.xlu0 %262
        %vm265 = vcmask 392192
        %v267 = vsel %vm265, %v227, 0
        %v270 = vsel %vm265, %v228, 0
        %272 = vmatprep.subr.mxu0 0.0
        %273 = vmatpush1.msra.mxu0 %v241
        %274 = vmatprep.subr.mxu0 0.0
        %275 = vmatpush1.msra.mxu0 %v242
        %276 = vmatprep.subr.mxu0 0.0
        %277 = vmatpush1.msra.mxu0 %v235
        %278 = vmatprep.subr.mxu0 0.0
        %279 = vmatpush1.msra.mxu0 %v236
        %280 = vmatprep.subr.mxu0 0.0
        %281 = vmatpush1.msra.mxu0 %v247
        %282 = vmatprep.subr.mxu0 0.0
        %283 = vmatpush1.msra.mxu0 %v248
        %284 = vmatprep.subr.mxu0 0.0
        %285 = vmatpush1.msra.mxu0 0.0
        %286 = vmatprep.subr.mxu0 0.0
        %287 = vmatpush1.msra.mxu0 0.0
        %288 = vmatprep.subr.mxu0 0.0
        %289 = vmatpush1.msra.mxu0 0.0
        %290 = vmatprep.subr.mxu0 0.0
        %291 = vmatpush1.msra.mxu0 0.0
        %292 = vmatprep.subr.mxu0 0.0
        %293 = vmatpush1.msra.mxu0 0.0
        %294 = vmatprep.subr.mxu0 0.0
        %295 = vmatpush1.msra.mxu0 0.0
        %296 = vmatprep.subr.mxu0 0.0
        %297 = vmatpush1.msra.mxu0 0.0
        %298 = vmatprep.subr.mxu0 0.0
        %299 = vmatpush1.msra.mxu0 0.0
        %300 = vmatprep.subr.mxu0 0.0
        %301 = vmatpush1.msra.mxu0 0.0
        %302 = vmatprep.subr.mxu0 0.0
        %303 = vmatpush1.msra.mxu0 0.0
        %304 = vmatprep.subr.mxu0 0.0
        %305 = vmatpush1.msra.mxu0 0.0
        %306 = vmatprep.subr.mxu0 0.0
        %307 = vmatpush1.msra.mxu0 0.0
        %308 = vmatprep.subr.mxu0 0.0
        %309 = vmatpush1.msra.mxu0 0.0
        %310 = vmatprep.subr.mxu0 0.0
        %311 = vmatpush1.msra.mxu0 0.0
        %312 = vmatprep.subr.mxu0 0.0
        %313 = vmatpush1.msra.mxu0 0.0
        %314 = vmatprep.subr.mxu0 0.0
        %315 = vmatpush1.msra.mxu0 0.0
        %316 = vmatprep.subr.mxu0 0.0
        %317 = vmatpush1.msra.mxu0 0.0
        %318 = vmatprep.subr.mxu0 0.0
        %319 = vmatpush1.msra.mxu0 0.0
        %320 = vmatprep.subr.mxu0 0.0
        %321 = vmatpush1.msra.mxu0 0.0
        %322 = vmatprep.subr.mxu0 0.0
        %323 = vmatpush1.msra.mxu0 0.0
        %324 = vmatprep.subr.mxu0 0.0
        %325 = vmatpush1.msra.mxu0 0.0
        %326 = vmatprep.subr.mxu0 0.0
        %327 = vmatpush1.msra.mxu0 0.0
        %328 = vmatprep.subr.mxu0 0.0
        %329 = vmatpush1.msra.mxu0 0.0
        %330 = vmatprep.subr.mxu0 0.0
        %331 = vmatpush1.msra.mxu0 0.0
        %332 = vmatprep.subr.mxu0 0.0
        %333 = vmatpush1.msra.mxu0 0.0
        %334 = vmatprep.subr.mxu0 0.0
        %335 = vmatpush1.msra.mxu0 0.0
        %336 = vmatprep.mubr.f32.mxu0 0.0
        %337 = vmatmul.mubr.f32.gmra.mrb[0].mxu0 %v267
        %v338 = vpop.f32.mrb[0].mxu0
        %v339 = vadd.f32 %v258, %v338
        %v340 = vpop.f32.mrb[0].mxu0
        %341 = vmatprep.mubr.f32.mxu0 0.0
        %342 = vmatmul.mubr.f32.gmra.mrb[0].mxu0 %v270
        %v343 = vpop.f32.mrb[0].mxu0
        %v344 = vadd.f32 %v263, %v343
        %v345 = vpop.f32.mrb[0].mxu0
        %346 = vdwg.mxu0
        %vm347 = vcmask 130048
        %v349 = vsel %vm347, %v229, 0
        %v352 = vsel %vm347, %v230, 0
        %354 = vmatprep.subr.mxu0 0.0
        %355 = vmatpush1.msra.mxu0 %v339
        %356 = vmatprep.subr.mxu0 0.0
        %357 = vmatpush1.msra.mxu0 %v344
        %358 = vmatprep.subr.mxu0 0.0
        %359 = vmatpush1.msra.mxu0 0.0
        %360 = vmatprep.subr.mxu0 0.0
        %361 = vmatpush1.msra.mxu0 0.0
        %362 = vmatprep.subr.mxu0 0.0
        %363 = vmatpush1.msra.mxu0 0.0
        %364 = vmatprep.subr.mxu0 0.0
        %365 = vmatpush1.msra.mxu0 0.0
        %366 = vmatprep.subr.mxu0 0.0
        %367 = vmatpush1.msra.mxu0 0.0
        %368 = vmatprep.subr.mxu0 0.0
        %369 = vmatpush1.msra.mxu0 0.0
        %370 = vmatprep.subr.mxu0 0.0
        %371 = vmatpush1.msra.mxu0 0.0
        %372 = vmatprep.subr.mxu0 0.0
        %373 = vmatpush1.msra.mxu0 0.0
        %374 = vmatprep.subr.mxu0 0.0
        %375 = vmatpush1.msra.mxu0 0.0
        %376 = vmatprep.subr.mxu0 0.0
        %377 = vmatpush1.msra.mxu0 0.0
        %378 = vmatprep.subr.mxu0 0.0
        %379 = vmatpush1.msra.mxu0 0.0
        %380 = vmatprep.subr.mxu0 0.0
        %381 = vmatpush1.msra.mxu0 0.0
        %382 = vmatprep.subr.mxu0 0.0
        %383 = vmatpush1.msra.mxu0 0.0
        %384 = vmatprep.subr.mxu0 0.0
        %385 = vmatpush1.msra.mxu0 0.0
        %386 = vmatprep.subr.mxu0 0.0
        %387 = vmatpush1.msra.mxu0 0.0
        %388 = vmatprep.subr.mxu0 0.0
        %389 = vmatpush1.msra.mxu0 0.0
        %390 = vmatprep.subr.mxu0 0.0
        %391 = vmatpush1.msra.mxu0 0.0
        %392 = vmatprep.subr.mxu0 0.0
        %393 = vmatpush1.msra.mxu0 0.0
        %394 = vmatprep.subr.mxu0 0.0
        %395 = vmatpush1.msra.mxu0 0.0
        %396 = vmatprep.subr.mxu0 0.0
        %397 = vmatpush1.msra.mxu0 0.0
        %398 = vmatprep.subr.mxu0 0.0
        %399 = vmatpush1.msra.mxu0 0.0
        %400 = vmatprep.subr.mxu0 0.0
        %401 = vmatpush1.msra.mxu0 0.0
        %402 = vmatprep.subr.mxu0 0.0
        %403 = vmatpush1.msra.mxu0 0.0
        %404 = vmatprep.subr.mxu0 0.0
        %405 = vmatpush1.msra.mxu0 0.0
        %406 = vmatprep.subr.mxu0 0.0
        %407 = vmatpush1.msra.mxu0 0.0
        %408 = vmatprep.subr.mxu0 0.0
        %409 = vmatpush1.msra.mxu0 0.0
        %410 = vmatprep.subr.mxu0 0.0
        %411 = vmatpush1.msra.mxu0 0.0
        %412 = vmatprep.subr.mxu0 0.0
        %413 = vmatpush1.msra.mxu0 0.0
        %414 = vmatprep.subr.mxu0 0.0
        %415 = vmatpush1.msra.mxu0 0.0
        %416 = vmatprep.subr.mxu0 0.0
        %417 = vmatpush1.msra.mxu0 0.0
        %418 = vmatprep.mubr.f32.mxu0 0.0
        %419 = vmatmul.mubr.f32.gmra.mrb[0].mxu0 %v349
        %v420 = vpop.f32.mrb[0].mxu0
        %v421 = vadd.f32 0.0, %v420
        %v422 = vpop.f32.mrb[0].mxu0
        %423 = vmatprep.mubr.f32.mxu0 0.0
        %424 = vmatmul.mubr.f32.gmra.mrb[0].mxu0 %v352
        %v425 = vpop.f32.mrb[0].mxu0
        %v426 = vadd.f32 0.0, %v425
        %v427 = vpop.f32.mrb[0].mxu0
        %428 = vdwg.mxu0
        %429 = vadd.xlane.f32.xlu0 %v421
        %v430 = vpop.xlane.xlu0 %429
        %431 = vadd.xlane.f32.xlu0 %v426
        %v432 = vpop.xlane.xlu0 %431
        %v433 = vsub.f32 %v339, %v430
        %v434 = vsub.f32 %v344, %v432
        %v435 = vmul.f32 %v433, %v433
        %v436 = vmul.f32 %v434, %v434
        %437 = vmatprep.subr.mxu0 0.0
        %438 = vmatpush1.msra.mxu0 %v435
        %439 = vmatprep.subr.mxu0 0.0
        %440 = vmatpush1.msra.mxu0 %v436
        %441 = vmatprep.subr.mxu0 0.0
        %442 = vmatpush1.msra.mxu0 0.0
        %443 = vmatprep.subr.mxu0 0.0
        %444 = vmatpush1.msra.mxu0 0.0
        %445 = vmatprep.subr.mxu0 0.0
        %446 = vmatpush1.msra.mxu0 0.0
        %447 = vmatprep.subr.mxu0 0.0
        %448 = vmatpush1.msra.mxu0 0.0
        %449 = vmatprep.subr.mxu0 0.0
        %450 = vmatpush1.msra.mxu0 0.0
        %451 = vmatprep.subr.mxu0 0.0
        %452 = vmatpush1.msra.mxu0 0.0
        %453 = vmatprep.subr.mxu0 0.0
        %454 = vmatpush1.msra.mxu0 0.0
        %455 = vmatprep.subr.mxu0 0.0
        %456 = vmatpush1.msra.mxu0 0.0
        %457 = vmatprep.subr.mxu0 0.0
        %458 = vmatpush1.msra.mxu0 0.0
        %459 = vmatprep.subr.mxu0 0.0
        %460 = vmatpush1.msra.mxu0 0.0
        %461 = vmatprep.subr.mxu0 0.0
        %462 = vmatpush1.msra.mxu0 0.0
        %463 = vmatprep.subr.mxu0 0.0
        %464 = vmatpush1.msra.mxu0 0.0
        %465 = vmatprep.subr.mxu0 0.0
        %466 = vmatpush1.msra.mxu0 0.0
        %467 = vmatprep.subr.mxu0 0.0
        %468 = vmatpush1.msra.mxu0 0.0
        %469 = vmatprep.subr.mxu0 0.0
        %470 = vmatpush1.msra.mxu0 0.0
        %471 = vmatprep.subr.mxu0 0.0
        %472 = vmatpush1.msra.mxu0 0.0
        %473 = vmatprep.subr.mxu0 0.0
        %474 = vmatpush1.msra.mxu0 0.0
        %475 = vmatprep.subr.mxu0 0.0
        %476 = vmatpush1.msra.mxu0 0.0
        %477 = vmatprep.subr.mxu0 0.0
        %478 = vmatpush1.msra.mxu0 0.0
        %479 = vmatprep.subr.mxu0 0.0
        %480 = vmatpush1.msra.mxu0 0.0
        %481 = vmatprep.subr.mxu0 0.0
        %482 = vmatpush1.msra.mxu0 0.0
        %483 = vmatprep.subr.mxu0 0.0
        %484 = vmatpush1.msra.mxu0 0.0
        %485 = vmatprep.subr.mxu0 0.0
        %486 = vmatpush1.msra.mxu0 0.0
        %487 = vmatprep.subr.mxu0 0.0
        %488 = vmatpush1.msra.mxu0 0.0
        %489 = vmatprep.subr.mxu0 0.0
        %490 = vmatpush1.msra.mxu0 0.0
        %491 = vmatprep.subr.mxu0 0.0
        %492 = vmatpush1.msra.mxu0 0.0
        %493 = vmatprep.subr.mxu0 0.0
        %494 = vmatpush1.msra.mxu0 0.0
        %495 = vmatprep.subr.mxu0 0.0
        %496 = vmatpush1.msra.mxu0 0.0
        %497 = vmatprep.subr.mxu0 0.0
        %498 = vmatpush1.msra.mxu0 0.0
        %499 = vmatprep.subr.mxu0 0.0
        %500 = vmatpush1.msra.mxu0 0.0
        %501 = vmatprep.mubr.f32.mxu0 0.0
        %502 = vmatmul.mubr.f32.gmra.mrb[0].mxu0 %v349
        %v503 = vpop.f32.mrb[0].mxu0
        %v504 = vadd.f32 0.0, %v503
        %v505 = vpop.f32.mrb[0].mxu0
        %506 = vmatprep.mubr.f32.mxu0 0.0
        %507 = vmatmul.mubr.f32.gmra.mrb[0].mxu0 %v352
        %v508 = vpop.f32.mrb[0].mxu0
        %v509 = vadd.f32 0.0, %v508
        %v510 = vpop.f32.mrb[0].mxu0
        %511 = vdwg.mxu0
        %512 = vadd.xlane.f32.xlu0 %v504
        %v513 = vpop.xlane.xlu0 %512
        %514 = vadd.xlane.f32.xlu0 %v509
        %v515 = vpop.xlane.xlu0 %514
        %v516 = vadd.f32 %v513, 1e-05
        %v517 = vadd.f32 %v515, 1e-05
        %v518 = vrsqrt.pop %v516
        %v519 = vrsqrt.pop %v517
        %v520 = vmul.f32 %v433, %v518
        %v521 = vmul.f32 %v434, %v519
        %523 = vset.pattern.permute.xlu0 0
        %524 = vperm.xlu0 %523, %v249
        %v525 = vpop.permute.xlu0 %524
        %528 = vset.pattern.permute.xlu0 0
        %529 = vperm.xlu0 %528, %v250
        %v530 = vpop.permute.xlu0 %529
        %v532 = vmul.f32 %v520, %v525
        %v533 = vmul.f32 %v521, %v530
        %535 = vset.pattern.permute.xlu0 0
        %536 = vperm.xlu0 %535, %v251
        %v537 = vpop.permute.xlu0 %536
        %540 = vset.pattern.permute.xlu0 0
        %541 = vperm.xlu0 %540, %v252
        %v542 = vpop.permute.xlu0 %541
        %v544 = vadd.f32 %v532, %v537
        %v545 = vadd.f32 %v533, %v542
        %v546 = vxor.u32 %v544, 2147483648
        %v547 = vxor.u32 %v545, 2147483648
        %v548 = vmul.f32 %v546, 1.442695
        %v549 = vpow.pop %v548
        %v550 = vmul.f32 %v547, 1.442695
        %v551 = vpow.pop %v550
        %v552 = vadd.f32 %v549, 1.0
        %v553 = vadd.f32 %v551, 1.0
        %v554 = vrcp.pop %v552
        %v555 = vmul.f32 1.0, %v554
        %v556 = vrcp.pop %v553
        %v557 = vmul.f32 1.0, %v556
        %v558 = vmul.f32 %v544, %v555
        %v559 = vmul.f32 %v545, %v557
        %v560 = vadd.f32 %v558, %v235
        %v561 = vadd.f32 %v559, %v236
        %562 = vst [vmem:[%s211] sm:$0xff] %v560
        %563 = vst [vmem:[%s211 + $0x8] sm:$0xff] %v561
        %s564 = scalar_lea.vmem %s217, 16
        %v565 = vld [vmem:[%s564] sm:$0xff]
        %v566 = vld [vmem:[%s564 + $0x8] sm:$0xff]
        %567 = vrot.lane.b32.xlu0 %v565, 1
        %v568 = vpop.permute.xlu0 %567
        %569 = vrot.lane.b32.xlu0 %v566, 1
        %v570 = vpop.permute.xlu0 %569
        %v571 = vsel %vm233, %v568, 0.0
        %v572 = vsel %vm233, %v570, 0.0
        %573 = vrot.lane.b32.xlu0 %v565, 127
        %v574 = vpop.permute.xlu0 %573
        %575 = vrot.lane.b32.xlu0 %v566, 127
        %v576 = vpop.permute.xlu0 %575
        %v577 = vsel %vm234, %v574, 0.0
        %v578 = vsel %vm234, %v576, 0.0
        %s579 = scalar_lea.vmem %s224, 48
        %v580 = vld [vmem:[%s579] sm:$0xff]
        %v581 = vld [vmem:[%s579 + $0x8] sm:$0xff]
        %v582 = vld [vmem:[%s579 + $0x10] sm:$0xff]
        %v583 = vld [vmem:[%s579 + $0x18] sm:$0xff]
        %v584 = vld [vmem:[%s579 + $0x20] sm:$0xff]
        %v585 = vld [vmem:[%s579 + $0x28] sm:$0xff]
        %587 = vset.pattern.permute.xlu0 0
        %588 = vperm.xlu0 %587, %v584
        %v589 = vpop.permute.xlu0 %588
        %592 = vset.pattern.permute.xlu0 0
        %593 = vperm.xlu0 %592, %v585
        %v594 = vpop.permute.xlu0 %593
        %596 = vmatprep.subr.mxu0 0.0
        %597 = vmatpush1.msra.mxu0 %v571
        %598 = vmatprep.subr.mxu0 0.0
        %599 = vmatpush1.msra.mxu0 %v572
        %600 = vmatprep.subr.mxu0 0.0
        %601 = vmatpush1.msra.mxu0 %v565
        %602 = vmatprep.subr.mxu0 0.0
        %603 = vmatpush1.msra.mxu0 %v566
        %604 = vmatprep.subr.mxu0 0.0
        %605 = vmatpush1.msra.mxu0 %v577
        %606 = vmatprep.subr.mxu0 0.0
        %607 = vmatpush1.msra.mxu0 %v578
        %608 = vmatprep.subr.mxu0 0.0
        %609 = vmatpush1.msra.mxu0 0.0
        %610 = vmatprep.subr.mxu0 0.0
        %611 = vmatpush1.msra.mxu0 0.0
        %612 = vmatprep.subr.mxu0 0.0
        %613 = vmatpush1.msra.mxu0 0.0
        %614 = vmatprep.subr.mxu0 0.0
        %615 = vmatpush1.msra.mxu0 0.0
        %616 = vmatprep.subr.mxu0 0.0
        %617 = vmatpush1.msra.mxu0 0.0
        %618 = vmatprep.subr.mxu0 0.0
        %619 = vmatpush1.msra.mxu0 0.0
        %620 = vmatprep.subr.mxu0 0.0
        %621 = vmatpush1.msra.mxu0 0.0
        %622 = vmatprep.subr.mxu0 0.0
        %623 = vmatpush1.msra.mxu0 0.0
        %624 = vmatprep.subr.mxu0 0.0
        %625 = vmatpush1.msra.mxu0 0.0
        %626 = vmatprep.subr.mxu0 0.0
        %627 = vmatpush1.msra.mxu0 0.0
        %628 = vmatprep.subr.mxu0 0.0
        %629 = vmatpush1.msra.mxu0 0.0
        %630 = vmatprep.subr.mxu0 0.0
        %631 = vmatpush1.msra.mxu0 0.0
        %632 = vmatprep.subr.mxu0 0.0
        %633 = vmatpush1.msra.mxu0 0.0
        %634 = vmatprep.subr.mxu0 0.0
        %635 = vmatpush1.msra.mxu0 0.0
        %636 = vmatprep.subr.mxu0 0.0
        %637 = vmatpush1.msra.mxu0 0.0
        %638 = vmatprep.subr.mxu0 0.0
        %639 = vmatpush1.msra.mxu0 0.0
        %640 = vmatprep.subr.mxu0 0.0
        %641 = vmatpush1.msra.mxu0 0.0
        %642 = vmatprep.subr.mxu0 0.0
        %643 = vmatpush1.msra.mxu0 0.0
        %644 = vmatprep.subr.mxu0 0.0
        %645 = vmatpush1.msra.mxu0 0.0
        %646 = vmatprep.subr.mxu0 0.0
        %647 = vmatpush1.msra.mxu0 0.0
        %648 = vmatprep.subr.mxu0 0.0
        %649 = vmatpush1.msra.mxu0 0.0
        %650 = vmatprep.subr.mxu0 0.0
        %651 = vmatpush1.msra.mxu0 0.0
        %652 = vmatprep.subr.mxu0 0.0
        %653 = vmatpush1.msra.mxu0 0.0
        %654 = vmatprep.subr.mxu0 0.0
        %655 = vmatpush1.msra.mxu0 0.0
        %656 = vmatprep.subr.mxu0 0.0
        %657 = vmatpush1.msra.mxu0 0.0
        %658 = vmatprep.subr.mxu0 0.0
        %659 = vmatpush1.msra.mxu0 0.0
        %660 = vmatprep.mubr.f32.mxu0 0.0
        %661 = vmatmul.mubr.f32.gmra.mrb[0].mxu0 %v267
        %v662 = vpop.f32.mrb[0].mxu0
        %v663 = vadd.f32 %v589, %v662
        %v664 = vpop.f32.mrb[0].mxu0
        %665 = vmatprep.mubr.f32.mxu0 0.0
        %666 = vmatmul.mubr.f32.gmra.mrb[0].mxu0 %v270
        %v667 = vpop.f32.mrb[0].mxu0
        %v668 = vadd.f32 %v594, %v667
        %v669 = vpop.f32.mrb[0].mxu0
        %670 = vdwg.mxu0
        %671 = vmatprep.subr.mxu0 0.0
        %672 = vmatpush1.msra.mxu0 %v663
        %673 = vmatprep.subr.mxu0 0.0
        %674 = vmatpush1.msra.mxu0 %v668
        %675 = vmatprep.subr.mxu0 0.0
        %676 = vmatpush1.msra.mxu0 0.0
        %677 = vmatprep.subr.mxu0 0.0
        %678 = vmatpush1.msra.mxu0 0.0
        %679 = vmatprep.subr.mxu0 0.0
        %680 = vmatpush1.msra.mxu0 0.0
        %681 = vmatprep.subr.mxu0 0.0
        %682 = vmatpush1.msra.mxu0 0.0
        %683 = vmatprep.subr.mxu0 0.0
        %684 = vmatpush1.msra.mxu0 0.0
        %685 = vmatprep.subr.mxu0 0.0
        %686 = vmatpush1.msra.mxu0 0.0
        %687 = vmatprep.subr.mxu0 0.0
        %688 = vmatpush1.msra.mxu0 0.0
        %689 = vmatprep.subr.mxu0 0.0
        %690 = vmatpush1.msra.mxu0 0.0
        %691 = vmatprep.subr.mxu0 0.0
        %692 = vmatpush1.msra.mxu0 0.0
        %693 = vmatprep.subr.mxu0 0.0
        %694 = vmatpush1.msra.mxu0 0.0
        %695 = vmatprep.subr.mxu0 0.0
        %696 = vmatpush1.msra.mxu0 0.0
        %697 = vmatprep.subr.mxu0 0.0
        %698 = vmatpush1.msra.mxu0 0.0
        %699 = vmatprep.subr.mxu0 0.0
        %700 = vmatpush1.msra.mxu0 0.0
        %701 = vmatprep.subr.mxu0 0.0
        %702 = vmatpush1.msra.mxu0 0.0
        %703 = vmatprep.subr.mxu0 0.0
        %704 = vmatpush1.msra.mxu0 0.0
        %705 = vmatprep.subr.mxu0 0.0
        %706 = vmatpush1.msra.mxu0 0.0
        %707 = vmatprep.subr.mxu0 0.0
        %708 = vmatpush1.msra.mxu0 0.0
        %709 = vmatprep.subr.mxu0 0.0
        %710 = vmatpush1.msra.mxu0 0.0
        %711 = vmatprep.subr.mxu0 0.0
        %712 = vmatpush1.msra.mxu0 0.0
        %713 = vmatprep.subr.mxu0 0.0
        %714 = vmatpush1.msra.mxu0 0.0
        %715 = vmatprep.subr.mxu0 0.0
        %716 = vmatpush1.msra.mxu0 0.0
        %717 = vmatprep.subr.mxu0 0.0
        %718 = vmatpush1.msra.mxu0 0.0
        %719 = vmatprep.subr.mxu0 0.0
        %720 = vmatpush1.msra.mxu0 0.0
        %721 = vmatprep.subr.mxu0 0.0
        %722 = vmatpush1.msra.mxu0 0.0
        %723 = vmatprep.subr.mxu0 0.0
        %724 = vmatpush1.msra.mxu0 0.0
        %725 = vmatprep.subr.mxu0 0.0
        %726 = vmatpush1.msra.mxu0 0.0
        %727 = vmatprep.subr.mxu0 0.0
        %728 = vmatpush1.msra.mxu0 0.0
        %729 = vmatprep.subr.mxu0 0.0
        %730 = vmatpush1.msra.mxu0 0.0
        %731 = vmatprep.subr.mxu0 0.0
        %732 = vmatpush1.msra.mxu0 0.0
        %733 = vmatprep.subr.mxu0 0.0
        %734 = vmatpush1.msra.mxu0 0.0
        %735 = vmatprep.mubr.f32.mxu0 0.0
        %736 = vmatmul.mubr.f32.gmra.mrb[0].mxu0 %v349
        %v737 = vpop.f32.mrb[0].mxu0
        %v738 = vadd.f32 0.0, %v737
        %v739 = vpop.f32.mrb[0].mxu0
        %740 = vmatprep.mubr.f32.mxu0 0.0
        %741 = vmatmul.mubr.f32.gmra.mrb[0].mxu0 %v352
        %v742 = vpop.f32.mrb[0].mxu0
        %v743 = vadd.f32 0.0, %v742
        %v744 = vpop.f32.mrb[0].mxu0
        %745 = vdwg.mxu0
        %746 = vadd.xlane.f32.xlu0 %v738
        %v747 = vpop.xlane.xlu0 %746
        %748 = vadd.xlane.f32.xlu0 %v743
        %v749 = vpop.xlane.xlu0 %748
        %v750 = vsub.f32 %v663, %v747
        %v751 = vsub.f32 %v668, %v749
        %v752 = vmul.f32 %v750, %v750
        %v753 = vmul.f32 %v751, %v751
        %754 = vmatprep.subr.mxu0 0.0
        %755 = vmatpush1.msra.mxu0 %v752
        %756 = vmatprep.subr.mxu0 0.0
        %757 = vmatpush1.msra.mxu0 %v753
        %758 = vmatprep.subr.mxu0 0.0
        %759 = vmatpush1.msra.mxu0 0.0
        %760 = vmatprep.subr.mxu0 0.0
        %761 = vmatpush1.msra.mxu0 0.0
        %762 = vmatprep.subr.mxu0 0.0
        %763 = vmatpush1.msra.mxu0 0.0
        %764 = vmatprep.subr.mxu0 0.0
        %765 = vmatpush1.msra.mxu0 0.0
        %766 = vmatprep.subr.mxu0 0.0
        %767 = vmatpush1.msra.mxu0 0.0
        %768 = vmatprep.subr.mxu0 0.0
        %769 = vmatpush1.msra.mxu0 0.0
        %770 = vmatprep.subr.mxu0 0.0
        %771 = vmatpush1.msra.mxu0 0.0
        %772 = vmatprep.subr.mxu0 0.0
        %773 = vmatpush1.msra.mxu0 0.0
        %774 = vmatprep.subr.mxu0 0.0
        %775 = vmatpush1.msra.mxu0 0.0
        %776 = vmatprep.subr.mxu0 0.0
        %777 = vmatpush1.msra.mxu0 0.0
        %778 = vmatprep.subr.mxu0 0.0
        %779 = vmatpush1.msra.mxu0 0.0
        %780 = vmatprep.subr.mxu0 0.0
        %781 = vmatpush1.msra.mxu0 0.0
        %782 = vmatprep.subr.mxu0 0.0
        %783 = vmatpush1.msra.mxu0 0.0
        %784 = vmatprep.subr.mxu0 0.0
        %785 = vmatpush1.msra.mxu0 0.0
        %786 = vmatprep.subr.mxu0 0.0
        %787 = vmatpush1.msra.mxu0 0.0
        %788 = vmatprep.subr.mxu0 0.0
        %789 = vmatpush1.msra.mxu0 0.0
        %790 = vmatprep.subr.mxu0 0.0
        %791 = vmatpush1.msra.mxu0 0.0
        %792 = vmatprep.subr.mxu0 0.0
        %793 = vmatpush1.msra.mxu0 0.0
        %794 = vmatprep.subr.mxu0 0.0
        %795 = vmatpush1.msra.mxu0 0.0
        %796 = vmatprep.subr.mxu0 0.0
        %797 = vmatpush1.msra.mxu0 0.0
        %798 = vmatprep.subr.mxu0 0.0
        %799 = vmatpush1.msra.mxu0 0.0
        %800 = vmatprep.subr.mxu0 0.0
        %801 = vmatpush1.msra.mxu0 0.0
        %802 = vmatprep.subr.mxu0 0.0
        %803 = vmatpush1.msra.mxu0 0.0
        %804 = vmatprep.subr.mxu0 0.0
        %805 = vmatpush1.msra.mxu0 0.0
        %806 = vmatprep.subr.mxu0 0.0
        %807 = vmatpush1.msra.mxu0 0.0
        %808 = vmatprep.subr.mxu0 0.0
        %809 = vmatpush1.msra.mxu0 0.0
        %810 = vmatprep.subr.mxu0 0.0
        %811 = vmatpush1.msra.mxu0 0.0
        %812 = vmatprep.subr.mxu0 0.0
        %813 = vmatpush1.msra.mxu0 0.0
        %814 = vmatprep.subr.mxu0 0.0
        %815 = vmatpush1.msra.mxu0 0.0
        %816 = vmatprep.subr.mxu0 0.0
        %817 = vmatpush1.msra.mxu0 0.0
        %818 = vmatprep.mubr.f32.mxu0 0.0
        %819 = vmatmul.mubr.f32.gmra.mrb[0].mxu0 %v349
        %v820 = vpop.f32.mrb[0].mxu0
        %v821 = vadd.f32 0.0, %v820
        %v822 = vpop.f32.mrb[0].mxu0
        %823 = vmatprep.mubr.f32.mxu0 0.0
        %824 = vmatmul.mubr.f32.gmra.mrb[0].mxu0 %v352
        %v825 = vpop.f32.mrb[0].mxu0
        %v826 = vadd.f32 0.0, %v825
        %v827 = vpop.f32.mrb[0].mxu0
        %828 = vdwg.mxu0
        %829 = vadd.xlane.f32.xlu0 %v821
        %v830 = vpop.xlane.xlu0 %829
        %831 = vadd.xlane.f32.xlu0 %v826
        %v832 = vpop.xlane.xlu0 %831
        %v833 = vadd.f32 %v830, 1e-05
        %v834 = vadd.f32 %v832, 1e-05
        %v835 = vrsqrt.pop %v833
        %v836 = vrsqrt.pop %v834
        %v837 = vmul.f32 %v750, %v835
        %v838 = vmul.f32 %v751, %v836
        %840 = vset.pattern.permute.xlu0 0
        %841 = vperm.xlu0 %840, %v580
        %v842 = vpop.permute.xlu0 %841
        %845 = vset.pattern.permute.xlu0 0
        %846 = vperm.xlu0 %845, %v581
        %v847 = vpop.permute.xlu0 %846
        %v849 = vmul.f32 %v837, %v842
        %v850 = vmul.f32 %v838, %v847
        %852 = vset.pattern.permute.xlu0 0
        %853 = vperm.xlu0 %852, %v582
        %v854 = vpop.permute.xlu0 %853
        %857 = vset.pattern.permute.xlu0 0
        %858 = vperm.xlu0 %857, %v583
        %v859 = vpop.permute.xlu0 %858
        %v861 = vadd.f32 %v849, %v854
        %v862 = vadd.f32 %v850, %v859
        %v863 = vxor.u32 %v861, 2147483648
        %v864 = vxor.u32 %v862, 2147483648
        %v865 = vmul.f32 %v863, 1.442695
        %v866 = vpow.pop %v865
        %v867 = vmul.f32 %v864, 1.442695
        %v868 = vpow.pop %v867
        %v869 = vadd.f32 %v866, 1.0
        %v870 = vadd.f32 %v868, 1.0
        %v871 = vrcp.pop %v869
        %v872 = vmul.f32 1.0, %v871
        %v873 = vrcp.pop %v870
        %v874 = vmul.f32 1.0, %v873
        %v875 = vmul.f32 %v861, %v872
        %v876 = vmul.f32 %v862, %v874
        %v877 = vadd.f32 %v875, %v565
        %v878 = vadd.f32 %v876, %v566
        %s879 = scalar_lea.vmem %s211, 16 [#allocation2]
        %880 = vst [vmem:[%s879] sm:$0xff] %v877
        %881 = vst [vmem:[%s879 + $0x8] sm:$0xff] %v878
        %s882 = sand.u32 %s120, 1
        %s883 = scalar_lea.sflag [#allocation3], %s882
        %s884 = sand.u32 %s120, 1
        %s885 = smul.addr %s884, 32
        %s886 = scalar_lea.vmem [#allocation2], %s885
        // Predicated region
        $region37: #{tpu_custom_call.1} parent=35 // pred_check
          %p887 = pneg %p130
        $region38: #{tpu_custom_call.1} parent=35 // pred_check_branch
          %889 = sbr.rel (%p887) target = $region40
        $region39: #{tpu_custom_call.1} parent=35 // pred_region
          %s890 = smul.u32 2, %s18
          %s892 = ssub.s32 512, 512
          %893 = vsyncadd %s883, %s892
          %s894 = smul.addr %s890, 2
          %s895 = smul.addr %s894, 128
          %s896 = scalar_lea.hbm %s4, %s895
          %s897 = sshll.u32 %s886, 4
          %s898 = int_to_ptr.vmem [resolvable:$true] %s897
          %903 = dma.vmem_to_hbm [thread:$0]  %s898, 512, %s896, %s883, 128, 128, 8
        $region40: #{tpu_custom_call.1} parent=35 // pred_fallthru
          _
      $region36: #{tpu_custom_call.1} parent=5 // pred_fallthru
        _
      %p904 = scmp.le.s32.totalorder 2, %s13
      // Predicated region
      $region41: #{tpu_custom_call.1} parent=5 // pred_check
        %p905 = pneg %p904
      $region42: #{tpu_custom_call.1} parent=5 // pred_check_branch
        %907 = sbr.rel (%p905) target = $region44
      $region43: #{tpu_custom_call.1} parent=5 // pred_region
        %s908 = ssub.s32 %s13, 2
        // Predicated region
        $region45: #{tpu_custom_call.1} parent=43 // pred_check
          %p909 = pneg %p136
        $region46: #{tpu_custom_call.1} parent=43 // pred_check_branch
          %911 = sbr.rel (%p909) target = $region48
        $region47: #{tpu_custom_call.1} parent=43 // pred_region
          %s912 = sand.u32 %s121, 1
          %s913 = scalar_lea.sflag [#allocation3], %s912
          %s914 = sand.u32 %s121, 1
          %s915 = smul.addr %s914, 32
          %s916 = scalar_lea.vmem [#allocation2], %s915
          %917 = dma.done %s913, 512
        $region48: #{tpu_custom_call.1} parent=43 // pred_fallthru
          _
      $region44: #{tpu_custom_call.1} parent=5 // pred_fallthru
        _
    $region6: #{tpu_custom_call.1} parent=1 // loop_footer
      %s17 = sadd.s32 1, %s13
    $region7: #{tpu_custom_call.1} parent=1 // loop_footer_branch
      %12 = sbr.rel target = $region3
    $region8: #{tpu_custom_call.1} parent=1 // loop_exit
      _
    %918 = vsyncpa [#allocation3], 1
    %s919 = scalar_lea.sflag [#allocation3], 1
    %920 = vsyncpa %s919, 1

</llo_original>
